<compile_context>
chip_gen: v7x
topology: tpu7x:2x2x1
jax: 0.10.0
libtpu: 0.0.40
codegen_flags: <defaults>
</compile_context>

<pallas_src>
import jax
import jax.numpy as jnp
from jax.experimental import pallas as pl
from jax.experimental.pallas import tpu as pltpu

LANE = 128
SUBLANE = 8


def _round_up(n, m):
    return ((n + m - 1) // m) * m


def mlp_kernel(x_ref, w1_ref, b1_ref, w2_ref, b2_ref, w3_ref, b3_ref, o_ref):
    # Whole forward for one batch tile: 3 MXU matmuls + bias adds + 2 VPU ReLUs,
    # all VMEM-resident. Accumulation is f32 regardless of operand dtype.
    wdt = w1_ref.dtype
    h1 = jnp.maximum(
        jnp.dot(x_ref[...], w1_ref[...], preferred_element_type=jnp.float32)
        + b1_ref[...], 0.0)
    h2 = jnp.maximum(
        jnp.dot(h1.astype(wdt), w2_ref[...], preferred_element_type=jnp.float32)
        + b2_ref[...], 0.0)
    out = jnp.dot(h2.astype(wdt), w3_ref[...],
                  preferred_element_type=jnp.float32) + b3_ref[...]
    o_ref[...] = out.astype(o_ref.dtype)


def simple_model_forward(x, params, *, batch_tile=512, operand_dtype=jnp.float32):
    w1, b1, w2, b2, w3, b3 = params
    B, d_in = x.shape
    h1_dim = w1.shape[1]
    h2_dim = w2.shape[1]
    d_out = w3.shape[1]

    # Pad only the hidden dims (VMEM-internal) to 128 lanes; x and out keep their
    # natural feature widths so no padded HBM traffic is manufactured.
    hp1 = _round_up(h1_dim, LANE)
    hp2 = _round_up(h2_dim, LANE)

    # Batch tiling: sublane-align, then tile. If the batch exceeds one tile, force
    # >= 2 grid steps so the "parallel" axis can shard across v7x's two TensorCores.
    bp = _round_up(B, SUBLANE)
    tb = min(batch_tile, bp)
    if bp > tb:
        tb = min(tb, _round_up(pl.cdiv(bp, 2), SUBLANE))
    tb = _round_up(tb, SUBLANE)
    bp = _round_up(bp, tb)
    grid = (pl.cdiv(bp, tb),)

    f32 = jnp.float32
    odt = operand_dtype

    # Operands: x padded on the batch dim only (tail rows are garbage but sliced off);
    # weights zero-padded on hidden dims (padded lanes stay exactly 0 through ReLU).
    x_pad = jnp.zeros((bp, d_in), odt).at[:B, :].set(x.astype(odt))
    w1_pad = jnp.zeros((d_in, hp1), odt).at[:, :h1_dim].set(w1.astype(odt))
    b1_pad = jnp.zeros((1, hp1), f32).at[:, :h1_dim].set(b1.reshape(1, -1))
    w2_pad = jnp.zeros((hp1, hp2), odt).at[:h1_dim, :h2_dim].set(w2.astype(odt))
    b2_pad = jnp.zeros((1, hp2), f32).at[:, :h2_dim].set(b2.reshape(1, -1))
    w3_pad = jnp.zeros((hp2, d_out), odt).at[:h2_dim, :].set(w3.astype(odt))
    b3_pad = b3.reshape(1, d_out).astype(f32)

    # x / out stream over the batch grid; weights & biases pinned to block (0, 0).
    x_spec = pl.BlockSpec((tb, d_in), lambda i: (i, 0))
    out_spec = pl.BlockSpec((tb, d_out), lambda i: (i, 0))
    resident = lambda shape: pl.BlockSpec(shape, lambda i: (0,) * len(shape))

    out_pad = pl.pallas_call(
        mlp_kernel,
        out_shape=jax.ShapeDtypeStruct((bp, d_out), f32),
        grid=grid,
        in_specs=[
            x_spec,
            resident(w1_pad.shape), resident(b1_pad.shape),
            resident(w2_pad.shape), resident(b2_pad.shape),
            resident(w3_pad.shape), resident(b3_pad.shape),
        ],
        out_specs=out_spec,
        compiler_params=pltpu.CompilerParams(
            dimension_semantics=("parallel",)),
    )(x_pad, w1_pad, b1_pad, w2_pad, b2_pad, w3_pad, b3_pad)

    return out_pad[:B, :]


def init_params(key, input_dim=10, hidden_dim=32, output_dim=2):
    # Deterministic init mimicking nn.Linear default (uniform +/- 1/sqrt(fan_in)).
    # Weights stored (in_features, out_features) so kernel computes x @ W + b
    # (equivalent to PyTorch's x @ W.T + b with W=(out, in)).
    ks = jax.random.split(key, 6)

    def linear(kw, kb, fan_in, fan_out):
        bound = 1.0 / jnp.sqrt(fan_in)
        w = jax.random.uniform(kw, (fan_in, fan_out), jnp.float32, -bound, bound)
        b = jax.random.uniform(kb, (1, fan_out), jnp.float32, -bound, bound)
        return w, b

    w1, b1 = linear(ks[0], ks[1], input_dim, hidden_dim)
    w2, b2 = linear(ks[2], ks[3], hidden_dim, hidden_dim)
    w3, b3 = linear(ks[4], ks[5], hidden_dim, output_dim)
    return (w1, b1, w2, b2, w3, b3)


def reference_forward(x, params):
    w1, b1, w2, b2, w3, b3 = params
    h1 = jnp.maximum(x @ w1 + b1, 0.0)
    h2 = jnp.maximum(h1 @ w2 + b2, 0.0)
    return h2 @ w3 + b3


if __name__ == "__main__":
    key = jax.random.PRNGKey(0)
    k_x, k_p = jax.random.split(key)

    batch, input_dim, hidden_dim, output_dim = 8, 10, 32, 2
    x = jax.random.normal(k_x, (batch, input_dim), dtype=jnp.float32)
    params = init_params(k_p, input_dim, hidden_dim, output_dim)
    ref = reference_forward(x, params)

    # f32 operand path: exact vs reference.
    out = simple_model_forward(x, params)
    out = jax.block_until_ready(out)
    assert out.shape == (batch, output_dim)
    assert jnp.allclose(out, ref, atol=1e-5, rtol=1e-5), "f32 Pallas output mismatch"

    # bf16 operand-streaming path: MXU reads bf16, accumulates f32.
    out_bf16 = simple_model_forward(x, params, operand_dtype=jnp.bfloat16)
    out_bf16 = jax.block_until_ready(out_bf16)
    assert out_bf16.shape == (batch, output_dim)
    assert jnp.allclose(out_bf16, ref, atol=3e-2, rtol=3e-2), "bf16 Pallas output mismatch"

    print("KERNEL_OK")
</pallas_src>

<mosaic_0001>
module attributes {stable_mosaic.version = 11 : i64} {
  func.func @mlp_kernel(%arg0: i32, %arg1: memref<8x10xf32, #tpu.memory_space<vmem>>, %arg2: memref<10x128xf32, #tpu.memory_space<vmem>>, %arg3: memref<1x128xf32, #tpu.memory_space<vmem>>, %arg4: memref<128x128xf32, #tpu.memory_space<vmem>>, %arg5: memref<1x128xf32, #tpu.memory_space<vmem>>, %arg6: memref<128x2xf32, #tpu.memory_space<vmem>>, %arg7: memref<1x2xf32, #tpu.memory_space<vmem>>, %arg8: memref<8x2xf32, #tpu.memory_space<vmem>>) attributes {dimension_semantics = [#tpu.dimension_semantics<parallel>], iteration_bounds = array<i64: 1>, scalar_prefetch = 0 : i64, scratch_operands = 0 : i64, tpu.core_type = #tpu.core_type<tc>, window_params = [{transform_indices = @transform_0, window_bounds = array<i64: 8, 10>}, {pipeline_mode = #tpu.pipeline_mode<synchronous>, transform_indices = @transform_1, window_bounds = array<i64: 10, 128>}, {pipeline_mode = #tpu.pipeline_mode<synchronous>, transform_indices = @transform_2, window_bounds = array<i64: 1, 128>}, {pipeline_mode = #tpu.pipeline_mode<synchronous>, transform_indices = @transform_3, window_bounds = array<i64: 128, 128>}, {pipeline_mode = #tpu.pipeline_mode<synchronous>, transform_indices = @transform_4, window_bounds = array<i64: 1, 128>}, {pipeline_mode = #tpu.pipeline_mode<synchronous>, transform_indices = @transform_5, window_bounds = array<i64: 128, 2>}, {pipeline_mode = #tpu.pipeline_mode<synchronous>, transform_indices = @transform_6, window_bounds = array<i64: 1, 2>}, {transform_indices = @transform_7, window_bounds = array<i64: 8, 2>}]} {
    %c0 = arith.constant 0 : index
    %c0_0 = arith.constant 0 : index
    %0 = vector.load %arg1[%c0, %c0_0] : memref<8x10xf32, #tpu.memory_space<vmem>>, vector<8x10xf32>
    %c0_1 = arith.constant 0 : index
    %c0_2 = arith.constant 0 : index
    %1 = vector.load %arg2[%c0_1, %c0_2] : memref<10x128xf32, #tpu.memory_space<vmem>>, vector<10x128xf32>
    %cst = arith.constant dense<0.000000e+00> : vector<8x128xf32>
    %2 = tpu.matmul %0, %1, %cst {dimension_numbers = #tpu.dot_dimension_numbers<[1], [0], [0], [1], [0, 0, 1, 1], [], []>} : vector<8x10xf32>, vector<10x128xf32>, vector<8x128xf32> -> vector<8x128xf32>
    %c0_3 = arith.constant 0 : index
    %c0_4 = arith.constant 0 : index
    %3 = vector.load %arg3[%c0_3, %c0_4] : memref<1x128xf32, #tpu.memory_space<vmem>>, vector<1x128xf32>
    %4 = vector.broadcast %3 : vector<1x128xf32> to vector<8x128xf32>
    %5 = arith.addf %2, %4 : vector<8x128xf32>
    %cst_5 = arith.constant 0.000000e+00 : f32
    %6 = vector.broadcast %cst_5 : f32 to vector<8x128xf32>
    %7 = arith.maximumf %5, %6 : vector<8x128xf32>
    %c0_6 = arith.constant 0 : index
    %c0_7 = arith.constant 0 : index
    %8 = vector.load %arg4[%c0_6, %c0_7] : memref<128x128xf32, #tpu.memory_space<vmem>>, vector<128x128xf32>
    %cst_8 = arith.constant dense<0.000000e+00> : vector<8x128xf32>
    %9 = tpu.matmul %7, %8, %cst_8 {dimension_numbers = #tpu.dot_dimension_numbers<[1], [0], [0], [1], [0, 0, 1, 1], [], []>} : vector<8x128xf32>, vector<128x128xf32>, vector<8x128xf32> -> vector<8x128xf32>
    %c0_9 = arith.constant 0 : index
    %c0_10 = arith.constant 0 : index
    %10 = vector.load %arg5[%c0_9, %c0_10] : memref<1x128xf32, #tpu.memory_space<vmem>>, vector<1x128xf32>
    %11 = vector.broadcast %10 : vector<1x128xf32> to vector<8x128xf32>
    %12 = arith.addf %9, %11 : vector<8x128xf32>
    %cst_11 = arith.constant 0.000000e+00 : f32
    %13 = vector.broadcast %cst_11 : f32 to vector<8x128xf32>
    %14 = arith.maximumf %12, %13 : vector<8x128xf32>
    %c0_12 = arith.constant 0 : index
    %c0_13 = arith.constant 0 : index
    %15 = vector.load %arg6[%c0_12, %c0_13] : memref<128x2xf32, #tpu.memory_space<vmem>>, vector<128x2xf32>
    %cst_14 = arith.constant dense<0.000000e+00> : vector<8x2xf32>
    %16 = tpu.matmul %14, %15, %cst_14 {dimension_numbers = #tpu.dot_dimension_numbers<[1], [0], [0], [1], [0, 0, 1, 1], [], []>} : vector<8x128xf32>, vector<128x2xf32>, vector<8x2xf32> -> vector<8x2xf32>
    %c0_15 = arith.constant 0 : index
    %c0_16 = arith.constant 0 : index
    %17 = vector.load %arg7[%c0_15, %c0_16] : memref<1x2xf32, #tpu.memory_space<vmem>>, vector<1x2xf32>
    %18 = vector.broadcast %17 : vector<1x2xf32> to vector<8x2xf32>
    %19 = arith.addf %16, %18 : vector<8x2xf32>
    %c0_17 = arith.constant 0 : index
    %c0_18 = arith.constant 0 : index
    %20 = vector.load %arg8[%c0_17, %c0_18] : memref<8x2xf32, #tpu.memory_space<vmem>>, vector<8x2xf32>
    tpu.vector_store %arg8[%c0_17, %c0_18], %19 {strides = array<i32>} : memref<8x2xf32, #tpu.memory_space<vmem>>, vector<8x2xf32>,
    return
  }
  func.func @transform_0(%arg0: i32) -> (i32, i32) {
    %c0_i32 = arith.constant 0 : i32
    %c0_i32_0 = arith.constant 0 : i32
    return %arg0, %c0_i32 : i32, i32
  }
  func.func @transform_1(%arg0: i32) -> (i32, i32) {
    %c0_i32 = arith.constant 0 : i32
    %c0_i32_0 = arith.constant 0 : i32
    %c0_i32_1 = arith.constant 0 : i32
    return %c0_i32, %c0_i32_0 : i32, i32
  }
  func.func @transform_2(%arg0: i32) -> (i32, i32) {
    %c0_i32 = arith.constant 0 : i32
    %c0_i32_0 = arith.constant 0 : i32
    %c0_i32_1 = arith.constant 0 : i32
    return %c0_i32, %c0_i32_0 : i32, i32
  }
  func.func @transform_3(%arg0: i32) -> (i32, i32) {
    %c0_i32 = arith.constant 0 : i32
    %c0_i32_0 = arith.constant 0 : i32
    %c0_i32_1 = arith.constant 0 : i32
    return %c0_i32, %c0_i32_0 : i32, i32
  }
  func.func @transform_4(%arg0: i32) -> (i32, i32) {
    %c0_i32 = arith.constant 0 : i32
    %c0_i32_0 = arith.constant 0 : i32
    %c0_i32_1 = arith.constant 0 : i32
    return %c0_i32, %c0_i32_0 : i32, i32
  }
  func.func @transform_5(%arg0: i32) -> (i32, i32) {
    %c0_i32 = arith.constant 0 : i32
    %c0_i32_0 = arith.constant 0 : i32
    %c0_i32_1 = arith.constant 0 : i32
    return %c0_i32, %c0_i32_0 : i32, i32
  }
  func.func @transform_6(%arg0: i32) -> (i32, i32) {
    %c0_i32 = arith.constant 0 : i32
    %c0_i32_0 = arith.constant 0 : i32
    %c0_i32_1 = arith.constant 0 : i32
    return %c0_i32, %c0_i32_0 : i32, i32
  }
  func.func @transform_7(%arg0: i32) -> (i32, i32) {
    %c0_i32 = arith.constant 0 : i32
    %c0_i32_0 = arith.constant 0 : i32
    return %arg0, %c0_i32 : i32, i32
  }
}

</mosaic_0001>

<llo_original>
// kernel: tpu_custom_call.1
$region0: #{tpu_custom_call.1}
  #allocation0 [shape = 'u32[]', space=smem, size = 0x4, offset = 0x4, fixed_abs, tag = 'smem constant byte address 0x4 - core index']
  #allocation1 [shape = 'u32[144,128]{1,0:T(1,128)}', space=vmem, size = 0x12000, scoped, tag = 'internal scratch']
  %s0 = inlined_call_operand.vmem [shape: f32[8,10], index: 0, kind: input, shape index: {}]
  %s1 = inlined_call_operand.hbm [shape: f32[10,128], index: 1, kind: input, shape index: {}]
  %s2 = inlined_call_operand.vmem [shape: f32[1,128], index: 2, kind: input, shape index: {}]
  %s3 = inlined_call_operand.vmem [shape: f32[128,128], index: 3, kind: input, shape index: {}]
  %s4 = inlined_call_operand.vmem [shape: f32[1,128], index: 4, kind: input, shape index: {}]
  %s5 = inlined_call_operand.vmem [shape: f32[128,2], index: 5, kind: input, shape index: {}]
  %s6 = inlined_call_operand.vmem [shape: f32[1,2], index: 6, kind: input, shape index: {}]
  %s7 = inlined_call_operand.vmem [shape: f32[8,2], index: 7, kind: output, shape index: {}]
  %s8 = sld [smem:[#allocation0]]
  $region42: #{tpu_custom_call.1} parent=0
    _
  %s10 = ssub.s32 1, %s8
  %s11 = scalar_select 0, %s10, %s8
  $region1: #{tpu_custom_call.1} parent=0
    #allocation2 [shape = 'u8[8192]{0}', space=vmem, size = 0x2000, scoped, tag = 'input window, operand 1, single buffered']
    #allocation3 [shape = 's32[1]{0}', space=sflag, size = 0x4, scoped, tag = 'scoped memory for tpu_custom_call.1']
    %12 = vsyncpa [#allocation3], 0
    // Predicated region
    $region2: #{tpu_custom_call.1} parent=1 // pred_check
      _
    $region3: #{tpu_custom_call.1} parent=1 // pred_check_branch
      %14 = sbr.rel (0) target = $region5
    $region4: #{tpu_custom_call.1} parent=1 // pred_region
      _
    $region5: #{tpu_custom_call.1} parent=1 // pred_fallthru
      _
    // Predicated region
    $region6: #{tpu_custom_call.1} parent=1 // pred_check
      _
    $region7: #{tpu_custom_call.1} parent=1 // pred_check_branch
      %16 = sbr.rel (0) target = $region9
    $region8: #{tpu_custom_call.1} parent=1 // pred_region
      %s18 = ssub.s32 256, 256
      %19 = vsyncadd [#allocation3], %s18
      %s20 = sshll.u32 [#allocation2], 4
      %s21 = int_to_ptr.vmem [resolvable:$true] %s20
      %26 = dma.hbm_to_vmem [thread:$0]  %s1, 256, %s21, [#allocation3], 128, 128, 8
    $region9: #{tpu_custom_call.1} parent=1 // pred_fallthru
      _
    // Predicated region
    $region10: #{tpu_custom_call.1} parent=1 // pred_check
      _
    $region11: #{tpu_custom_call.1} parent=1 // pred_check_branch
      %28 = sbr.rel (0) target = $region13
    $region12: #{tpu_custom_call.1} parent=1 // pred_region
      _
    $region13: #{tpu_custom_call.1} parent=1 // pred_fallthru
      _
    // Predicated region
    $region14: #{tpu_custom_call.1} parent=1 // pred_check
      _
    $region15: #{tpu_custom_call.1} parent=1 // pred_check_branch
      %30 = sbr.rel (0) target = $region17
    $region16: #{tpu_custom_call.1} parent=1 // pred_region
      _
    $region17: #{tpu_custom_call.1} parent=1 // pred_fallthru
      _
    // Predicated region
    $region18: #{tpu_custom_call.1} parent=1 // pred_check
      _
    $region19: #{tpu_custom_call.1} parent=1 // pred_check_branch
      %32 = sbr.rel (0) target = $region21
    $region20: #{tpu_custom_call.1} parent=1 // pred_region
      _
    $region21: #{tpu_custom_call.1} parent=1 // pred_fallthru
      _
    // Predicated region
    $region22: #{tpu_custom_call.1} parent=1 // pred_check
      _
    $region23: #{tpu_custom_call.1} parent=1 // pred_check_branch
      %34 = sbr.rel (0) target = $region25
    $region24: #{tpu_custom_call.1} parent=1 // pred_region
      _
    $region25: #{tpu_custom_call.1} parent=1 // pred_fallthru
      _
    // Predicated region
    $region26: #{tpu_custom_call.1} parent=1 // pred_check
      _
    $region27: #{tpu_custom_call.1} parent=1 // pred_check_branch
      %36 = sbr.rel (0) target = $region29
    $region28: #{tpu_custom_call.1} parent=1 // pred_region
      _
    $region29: #{tpu_custom_call.1} parent=1 // pred_fallthru
      _
    // Predicated region
    $region30: #{tpu_custom_call.1} parent=1 // pred_check
      _
    $region31: #{tpu_custom_call.1} parent=1 // pred_check_branch
      %38 = sbr.rel (0) target = $region33
    $region32: #{tpu_custom_call.1} parent=1 // pred_region
      %39 = dma.done [#allocation3], 256
    $region33: #{tpu_custom_call.1} parent=1 // pred_fallthru
      _
    %v40 = vld [vmem:[%s0] sm:$0xff]
    %v41 = vld [vmem:[#allocation2] sm:$0xff]
    %v42 = vld [vmem:[#allocation2 + $0x8] sm:$0x3]
    %v43 = vld [vmem:[%s2] sm:$0x1]
    %v45 = vlaneseq
    %v46 = vshrl.u32 %v45, 7
    %v47 = vsub.s32 0, %v46
    %v48 = vrot.slane %v43, %v47
    %vm50 = vcmask 80896
    %v52 = vsel %vm50, %v40, 0
    %vm54 = vcmask 1041408
    %v56 = vsel %vm54, %v42, 0
    %58 = vmatprep.subr.mxu0 0.0
    %59 = vmatpush1.msra.mxu0 %v41
    %60 = vmatprep.subr.mxu0 0.0
    %61 = vmatpush1.msra.mxu0 %v56
    %62 = vmatprep.subr.mxu0 0.0
    %63 = vmatpush1.msra.mxu0 0.0
    %64 = vmatprep.subr.mxu0 0.0
    %65 = vmatpush1.msra.mxu0 0.0
    %66 = vmatprep.subr.mxu0 0.0
    %67 = vmatpush1.msra.mxu0 0.0
    %68 = vmatprep.subr.mxu0 0.0
    %69 = vmatpush1.msra.mxu0 0.0
    %70 = vmatprep.subr.mxu0 0.0
    %71 = vmatpush1.msra.mxu0 0.0
    %72 = vmatprep.subr.mxu0 0.0
    %73 = vmatpush1.msra.mxu0 0.0
    %74 = vmatprep.subr.mxu0 0.0
    %75 = vmatpush1.msra.mxu0 0.0
    %76 = vmatprep.subr.mxu0 0.0
    %77 = vmatpush1.msra.mxu0 0.0
    %78 = vmatprep.subr.mxu0 0.0
    %79 = vmatpush1.msra.mxu0 0.0
    %80 = vmatprep.subr.mxu0 0.0
    %81 = vmatpush1.msra.mxu0 0.0
    %82 = vmatprep.subr.mxu0 0.0
    %83 = vmatpush1.msra.mxu0 0.0
    %84 = vmatprep.subr.mxu0 0.0
    %85 = vmatpush1.msra.mxu0 0.0
    %86 = vmatprep.subr.mxu0 0.0
    %87 = vmatpush1.msra.mxu0 0.0
    %88 = vmatprep.subr.mxu0 0.0
    %89 = vmatpush1.msra.mxu0 0.0
    %90 = vmatprep.subr.mxu0 0.0
    %91 = vmatpush1.msra.mxu0 0.0
    %92 = vmatprep.subr.mxu0 0.0
    %93 = vmatpush1.msra.mxu0 0.0
    %94 = vmatprep.subr.mxu0 0.0
    %95 = vmatpush1.msra.mxu0 0.0
    %96 = vmatprep.subr.mxu0 0.0
    %97 = vmatpush1.msra.mxu0 0.0
    %98 = vmatprep.subr.mxu0 0.0
    %99 = vmatpush1.msra.mxu0 0.0
    %100 = vmatprep.subr.mxu0 0.0
    %101 = vmatpush1.msra.mxu0 0.0
    %102 = vmatprep.subr.mxu0 0.0
    %103 = vmatpush1.msra.mxu0 0.0
    %104 = vmatprep.subr.mxu0 0.0
    %105 = vmatpush1.msra.mxu0 0.0
    %106 = vmatprep.subr.mxu0 0.0
    %107 = vmatpush1.msra.mxu0 0.0
    %108 = vmatprep.subr.mxu0 0.0
    %109 = vmatpush1.msra.mxu0 0.0
    %110 = vmatprep.subr.mxu0 0.0
    %111 = vmatpush1.msra.mxu0 0.0
    %112 = vmatprep.subr.mxu0 0.0
    %113 = vmatpush1.msra.mxu0 0.0
    %114 = vmatprep.subr.mxu0 0.0
    %115 = vmatpush1.msra.mxu0 0.0
    %116 = vmatprep.subr.mxu0 0.0
    %117 = vmatpush1.msra.mxu0 0.0
    %118 = vmatprep.subr.mxu0 0.0
    %119 = vmatpush1.msra.mxu0 0.0
    %120 = vmatprep.subr.mxu0 0.0
    %121 = vmatpush1.msra.mxu0 0.0
    %122 = vmatprep.mubr.f32.mxu0 0.0
    %123 = vmatmul.mubr.f32.gmra.mrb[0].mxu0 %v52
    %v124 = vpop.f32.mrb[0].mxu0
    %v125 = vadd.f32 %v48, %v124
    %v126 = vpop.f32.mrb[0].mxu0
    %127 = vdwg.mxu0
    %v128 = vmax.f32 %v125, 0.0
    %v129 = vld [vmem:[%s3] sm:$0xff]
    %v130 = vld [vmem:[%s3 + $0x8] sm:$0xff]
    %v131 = vld [vmem:[%s3 + $0x10] sm:$0xff]
    %v132 = vld [vmem:[%s3 + $0x18] sm:$0xff]
    %v133 = vld [vmem:[%s3 + $0x20] sm:$0xff]
    %v134 = vld [vmem:[%s3 + $0x28] sm:$0xff]
    %v135 = vld [vmem:[%s3 + $0x30] sm:$0xff]
    %v136 = vld [vmem:[%s3 + $0x38] sm:$0xff]
    %v137 = vld [vmem:[%s3 + $0x40] sm:$0xff]
    %v138 = vld [vmem:[%s3 + $0x48] sm:$0xff]
    %v139 = vld [vmem:[%s3 + $0x50] sm:$0xff]
    %v140 = vld [vmem:[%s3 + $0x58] sm:$0xff]
    %v141 = vld [vmem:[%s3 + $0x60] sm:$0xff]
    %v142 = vld [vmem:[%s3 + $0x68] sm:$0xff]
    %v143 = vld [vmem:[%s3 + $0x70] sm:$0xff]
    %v144 = vld [vmem:[%s3 + $0x78] sm:$0xff]
    %v145 = vld [vmem:[%s4] sm:$0x1]
    %v147 = vlaneseq
    %v148 = vshrl.u32 %v147, 7
    %v149 = vsub.s32 0, %v148
    %v150 = vrot.slane %v145, %v149
    %152 = vmatprep.subr.mxu0 0.0
    %153 = vmatpush1.msra.mxu0 %v129
    %154 = vmatprep.subr.mxu0 0.0
    %155 = vmatpush1.msra.mxu0 %v130
    %156 = vmatprep.subr.mxu0 0.0
    %157 = vmatpush1.msra.mxu0 %v131
    %158 = vmatprep.subr.mxu0 0.0
    %159 = vmatpush1.msra.mxu0 %v132
    %160 = vmatprep.subr.mxu0 0.0
    %161 = vmatpush1.msra.mxu0 %v133
    %162 = vmatprep.subr.mxu0 0.0
    %163 = vmatpush1.msra.mxu0 %v134
    %164 = vmatprep.subr.mxu0 0.0
    %165 = vmatpush1.msra.mxu0 %v135
    %166 = vmatprep.subr.mxu0 0.0
    %167 = vmatpush1.msra.mxu0 %v136
    %168 = vmatprep.subr.mxu0 0.0
    %169 = vmatpush1.msra.mxu0 %v137
    %170 = vmatprep.subr.mxu0 0.0
    %171 = vmatpush1.msra.mxu0 %v138
    %172 = vmatprep.subr.mxu0 0.0
    %173 = vmatpush1.msra.mxu0 %v139
    %174 = vmatprep.subr.mxu0 0.0
    %175 = vmatpush1.msra.mxu0 %v140
    %176 = vmatprep.subr.mxu0 0.0
    %177 = vmatpush1.msra.mxu0 %v141
    %178 = vmatprep.subr.mxu0 0.0
    %179 = vmatpush1.msra.mxu0 %v142
    %180 = vmatprep.subr.mxu0 0.0
    %181 = vmatpush1.msra.mxu0 %v143
    %182 = vmatprep.subr.mxu0 0.0
    %183 = vmatpush1.msra.mxu0 %v144
    %184 = vmatprep.subr.mxu0 0.0
    %185 = vmatpush1.msra.mxu0 0.0
    %186 = vmatprep.subr.mxu0 0.0
    %187 = vmatpush1.msra.mxu0 0.0
    %188 = vmatprep.subr.mxu0 0.0
    %189 = vmatpush1.msra.mxu0 0.0
    %190 = vmatprep.subr.mxu0 0.0
    %191 = vmatpush1.msra.mxu0 0.0
    %192 = vmatprep.subr.mxu0 0.0
    %193 = vmatpush1.msra.mxu0 0.0
    %194 = vmatprep.subr.mxu0 0.0
    %195 = vmatpush1.msra.mxu0 0.0
    %196 = vmatprep.subr.mxu0 0.0
    %197 = vmatpush1.msra.mxu0 0.0
    %198 = vmatprep.subr.mxu0 0.0
    %199 = vmatpush1.msra.mxu0 0.0
    %200 = vmatprep.subr.mxu0 0.0
    %201 = vmatpush1.msra.mxu0 0.0
    %202 = vmatprep.subr.mxu0 0.0
    %203 = vmatpush1.msra.mxu0 0.0
    %204 = vmatprep.subr.mxu0 0.0
    %205 = vmatpush1.msra.mxu0 0.0
    %206 = vmatprep.subr.mxu0 0.0
    %207 = vmatpush1.msra.mxu0 0.0
    %208 = vmatprep.subr.mxu0 0.0
    %209 = vmatpush1.msra.mxu0 0.0
    %210 = vmatprep.subr.mxu0 0.0
    %211 = vmatpush1.msra.mxu0 0.0
    %212 = vmatprep.subr.mxu0 0.0
    %213 = vmatpush1.msra.mxu0 0.0
    %214 = vmatprep.subr.mxu0 0.0
    %215 = vmatpush1.msra.mxu0 0.0
    %216 = vmatprep.mubr.f32.mxu0 0.0
    %217 = vmatmul.mubr.f32.gmra.mrb[0].mxu0 %v128
    %v218 = vpop.f32.mrb[0].mxu0
    %v219 = vadd.f32 %v150, %v218
    %v220 = vpop.f32.mrb[0].mxu0
    %221 = vdwg.mxu0
    %v222 = vmax.f32 %v219, 0.0
    %v223 = vld [vmem:[%s5] sm:$0xff]
    %v224 = vld [vmem:[%s5 + $0x8] sm:$0xff]
    %v225 = vld [vmem:[%s5 + $0x10] sm:$0xff]
    %v226 = vld [vmem:[%s5 + $0x18] sm:$0xff]
    %v227 = vld [vmem:[%s5 + $0x20] sm:$0xff]
    %v228 = vld [vmem:[%s5 + $0x28] sm:$0xff]
    %v229 = vld [vmem:[%s5 + $0x30] sm:$0xff]
    %v230 = vld [vmem:[%s5 + $0x38] sm:$0xff]
    %v231 = vld [vmem:[%s5 + $0x40] sm:$0xff]
    %v232 = vld [vmem:[%s5 + $0x48] sm:$0xff]
    %v233 = vld [vmem:[%s5 + $0x50] sm:$0xff]
    %v234 = vld [vmem:[%s5 + $0x58] sm:$0xff]
    %v235 = vld [vmem:[%s5 + $0x60] sm:$0xff]
    %v236 = vld [vmem:[%s5 + $0x68] sm:$0xff]
    %v237 = vld [vmem:[%s5 + $0x70] sm:$0xff]
    %v238 = vld [vmem:[%s5 + $0x78] sm:$0xff]
    %v239 = vld [vmem:[%s6] sm:$0x1]
    %v241 = vlaneseq
    %v242 = vshrl.u32 %v241, 7
    %v243 = vsub.s32 0, %v242
    %v244 = vrot.slane %v239, %v243
    %246 = vmatprep.subr.mxu0 0.0
    %247 = vmatpush1.msra.mxu0 %v223
    %248 = vmatprep.subr.mxu0 0.0
    %249 = vmatpush1.msra.mxu0 %v224
    %250 = vmatprep.subr.mxu0 0.0
    %251 = vmatpush1.msra.mxu0 %v225
    %252 = vmatprep.subr.mxu0 0.0
    %253 = vmatpush1.msra.mxu0 %v226
    %254 = vmatprep.subr.mxu0 0.0
    %255 = vmatpush1.msra.mxu0 %v227
    %256 = vmatprep.subr.mxu0 0.0
    %257 = vmatpush1.msra.mxu0 %v228
    %258 = vmatprep.subr.mxu0 0.0
    %259 = vmatpush1.msra.mxu0 %v229
    %260 = vmatprep.subr.mxu0 0.0
    %261 = vmatpush1.msra.mxu0 %v230
    %262 = vmatprep.subr.mxu0 0.0
    %263 = vmatpush1.msra.mxu0 %v231
    %264 = vmatprep.subr.mxu0 0.0
    %265 = vmatpush1.msra.mxu0 %v232
    %266 = vmatprep.subr.mxu0 0.0
    %267 = vmatpush1.msra.mxu0 %v233
    %268 = vmatprep.subr.mxu0 0.0
    %269 = vmatpush1.msra.mxu0 %v234
    %270 = vmatprep.subr.mxu0 0.0
    %271 = vmatpush1.msra.mxu0 %v235
    %272 = vmatprep.subr.mxu0 0.0
    %273 = vmatpush1.msra.mxu0 %v236
    %274 = vmatprep.subr.mxu0 0.0
    %275 = vmatpush1.msra.mxu0 %v237
    %276 = vmatprep.subr.mxu0 0.0
    %277 = vmatpush1.msra.mxu0 %v238
    %278 = vmatprep.subr.mxu0 0.0
    %279 = vmatpush1.msra.mxu0 0.0
    %280 = vmatprep.subr.mxu0 0.0
    %281 = vmatpush1.msra.mxu0 0.0
    %282 = vmatprep.subr.mxu0 0.0
    %283 = vmatpush1.msra.mxu0 0.0
    %284 = vmatprep.subr.mxu0 0.0
    %285 = vmatpush1.msra.mxu0 0.0
    %286 = vmatprep.subr.mxu0 0.0
    %287 = vmatpush1.msra.mxu0 0.0
    %288 = vmatprep.subr.mxu0 0.0
    %289 = vmatpush1.msra.mxu0 0.0
    %290 = vmatprep.subr.mxu0 0.0
    %291 = vmatpush1.msra.mxu0 0.0
    %292 = vmatprep.subr.mxu0 0.0
    %293 = vmatpush1.msra.mxu0 0.0
    %294 = vmatprep.subr.mxu0 0.0
    %295 = vmatpush1.msra.mxu0 0.0
    %296 = vmatprep.subr.mxu0 0.0
    %297 = vmatpush1.msra.mxu0 0.0
    %298 = vmatprep.subr.mxu0 0.0
    %299 = vmatpush1.msra.mxu0 0.0
    %300 = vmatprep.subr.mxu0 0.0
    %301 = vmatpush1.msra.mxu0 0.0
    %302 = vmatprep.subr.mxu0 0.0
    %303 = vmatpush1.msra.mxu0 0.0
    %304 = vmatprep.subr.mxu0 0.0
    %305 = vmatpush1.msra.mxu0 0.0
    %306 = vmatprep.subr.mxu0 0.0
    %307 = vmatpush1.msra.mxu0 0.0
    %308 = vmatprep.subr.mxu0 0.0
    %309 = vmatpush1.msra.mxu0 0.0
    %310 = vmatprep.mubr.f32.mxu0 0.0
    %311 = vmatmul.mubr.f32.gmra.mrb[0].mxu0 %v222
    %v312 = vpop.f32.mrb[0].mxu0
    %v313 = vadd.f32 %v244, %v312
    %v314 = vpop.f32.mrb[0].mxu0
    %315 = vdwg.mxu0
    %vm316 = vcmask 15360
    %317 = vst.msk [vmem:[%s7] sm:$0xff] %vm316, %v313
    // Predicated region
    $region34: #{tpu_custom_call.1} parent=1 // pred_check
      _
    $region35: #{tpu_custom_call.1} parent=1 // pred_check_branch
      %319 = sbr.rel (0) target = $region37
    $region36: #{tpu_custom_call.1} parent=1 // pred_region
      _
    $region37: #{tpu_custom_call.1} parent=1 // pred_fallthru
      _
    // Predicated region
    $region38: #{tpu_custom_call.1} parent=1 // pred_check
      _
    $region39: #{tpu_custom_call.1} parent=1 // pred_check_branch
      %321 = sbr.rel (0) target = $region41
    $region40: #{tpu_custom_call.1} parent=1 // pred_region
      _
    $region41: #{tpu_custom_call.1} parent=1 // pred_fallthru
      _
    %322 = vsyncpa [#allocation3], 1

</llo_original>
